<compile_context>
chip_gen: v7x
topology: tpu7x:2x2x1
jax: 0.10.0
libtpu: 0.0.40
codegen_flags: <defaults>
</compile_context>

<pallas_src>
import math

import jax
import jax.numpy as jnp
import numpy as np
from jax.experimental import pallas as pl
from jax.experimental.pallas import tpu as pltpu


def _pick_tile(dim: int, preferred: int) -> int:
    """Tile size that evenly divides `dim`: `preferred` if it divides, else full dim."""
    if dim <= preferred:
        return dim
    return preferred if dim % preferred == 0 else dim


# ---------------------------------------------------------------------------
# Kernel 1: tiled dense projection  x [M, K] @ w [K, N] -> [M, N]
#   grid = (M//tm, N//tn, K//tk), fp32 accumulator in VMEM scratch,
#   bf16 MXU operands, K axis is the ("arbitrary") reduction axis.
# ---------------------------------------------------------------------------
def _matmul_kernel(x_ref, w_ref, o_ref, acc_ref):
    @pl.when(pl.program_id(2) == 0)
    def _():
        acc_ref[...] = jnp.zeros_like(acc_ref)

    acc_ref[...] += jnp.dot(
        x_ref[...].astype(jnp.bfloat16),
        w_ref[...].astype(jnp.bfloat16),
        preferred_element_type=jnp.float32,
    )

    @pl.when(pl.program_id(2) == pl.num_programs(2) - 1)
    def _():
        o_ref[...] = acc_ref[...].astype(o_ref.dtype)


def linear(x2d, w, *, tm=256, tn=256, tk=512):
    M, K = x2d.shape
    K2, N = w.shape
    assert K == K2
    tm = _pick_tile(M, tm)      # multiple of 8 when tiled (256), else full dim
    tn = _pick_tile(N, tn)      # multiple of 128 when tiled, else full dim
    tk = _pick_tile(K, tk)      # multiple of 128 when tiled, else full dim
    grid = (M // tm, N // tn, K // tk)
    return pl.pallas_call(
        _matmul_kernel,
        out_shape=jax.ShapeDtypeStruct((M, N), x2d.dtype),
        grid=grid,
        in_specs=[
            pl.BlockSpec((tm, tk), lambda i, j, k: (i, k)),
            pl.BlockSpec((tk, tn), lambda i, j, k: (k, j)),
        ],
        out_specs=pl.BlockSpec((tm, tn), lambda i, j, k: (i, j)),
        scratch_shapes=[pltpu.VMEM((tm, tn), jnp.float32)],
        compiler_params=pltpu.CompilerParams(
            dimension_semantics=("parallel", "parallel", "arbitrary"),
            vmem_limit_bytes=64 * 1024 * 1024,
        ),
    )(x2d, w)


# ---------------------------------------------------------------------------
# Kernel 2: flash-style attention.  One (batch, q-tile) owns an online-softmax
# accumulator; the KV axis is the reduction grid axis.  All heads per step.
#   mask is int8 [B, Lq, Lk], 1 = masked (do NOT attend), broadcast over heads.
#   The 1/sqrt(D) scale is already folded into w_q.
# ---------------------------------------------------------------------------
def _flash_kernel(q_ref, k_ref, v_ref, m_ref, o_ref, m_scr, l_scr, acc_scr):
    kv = pl.program_id(2)

    @pl.when(kv == 0)
    def _():
        m_scr[...] = jnp.full_like(m_scr, -jnp.inf)
        l_scr[...] = jnp.zeros_like(l_scr)
        acc_scr[...] = jnp.zeros_like(acc_scr)

    q = q_ref[0].astype(jnp.bfloat16)          # [H, tq,  D]
    k = k_ref[0].astype(jnp.bfloat16)          # [H, tkv, D]
    v = v_ref[0].astype(jnp.bfloat16)          # [H, tkv, D]
    masked = (m_ref[0] > 0)[None, :, :]        # [1, tq, tkv] bool

    # scores in fp32 (MXU accumulates fp32 from bf16 operands)
    s = jnp.einsum("hqd,hkd->hqk", q, k, preferred_element_type=jnp.float32)
    s = jnp.where(masked, jnp.float32(-1e18), s)

    m_prev = m_scr[...]                                        # [H, tq, 1]
    m_new = jnp.maximum(m_prev, jnp.max(s, axis=-1, keepdims=True))
    alpha = jnp.exp(m_prev - m_new)
    p = jnp.exp(s - m_new)                                     # fp32 [H, tq, tkv]

    l_scr[...] = alpha * l_scr[...] + jnp.sum(p, axis=-1, keepdims=True)
    acc_scr[...] = alpha * acc_scr[...] + jnp.einsum(
        "hqk,hkd->hqd", p.astype(jnp.bfloat16), v,
        preferred_element_type=jnp.float32)
    m_scr[...] = m_new

    @pl.when(kv == pl.num_programs(2) - 1)
    def _():
        o_ref[0] = (acc_scr[...] * pl.reciprocal(l_scr[...], approx=True)
                    ).astype(o_ref.dtype)


def flash_attention(q, k, v, mask_i8, *, tq=128, tkv=512):
    # q: [B, H, Lq, D]   k, v: [B, H, Lk, D]   mask_i8: [B, Lq, Lk]
    B, H, Lq, D = q.shape
    Lk = k.shape[2]
    tq = _pick_tile(Lq, tq)
    tkv = _pick_tile(Lk, tkv)
    grid = (B, Lq // tq, Lk // tkv)
    return pl.pallas_call(
        _flash_kernel,
        out_shape=jax.ShapeDtypeStruct((B, H, Lq, D), q.dtype),
        grid=grid,
        in_specs=[
            pl.BlockSpec((1, H, tq, D), lambda b, qi, kv: (b, 0, qi, 0)),
            pl.BlockSpec((1, H, tkv, D), lambda b, qi, kv: (b, 0, kv, 0)),
            pl.BlockSpec((1, H, tkv, D), lambda b, qi, kv: (b, 0, kv, 0)),
            pl.BlockSpec((1, tq, tkv), lambda b, qi, kv: (b, qi, kv)),
        ],
        out_specs=pl.BlockSpec((1, H, tq, D), lambda b, qi, kv: (b, 0, qi, 0)),
        scratch_shapes=[
            pltpu.VMEM((H, tq, 1), jnp.float32),   # running max
            pltpu.VMEM((H, tq, 1), jnp.float32),   # running sum
            pltpu.VMEM((H, tq, D), jnp.float32),   # output accumulator
        ],
        compiler_params=pltpu.CompilerParams(
            dimension_semantics=("parallel", "parallel", "arbitrary"),
            vmem_limit_bytes=64 * 1024 * 1024,
        ),
    )(q, k, v, mask_i8)


# ---------------------------------------------------------------------------
# Parameter prep (done once, outside the forward):
#   * fold 1/sqrt(dim_per_head) into w_q
#   * fuse w_k / w_v into a single [E, 2*H*D] weight
# ---------------------------------------------------------------------------
def prepare_params(raw, dim_per_head):
    return {
        "w_q": raw["w_q"] / math.sqrt(dim_per_head),
        "w_kv": jnp.concatenate([raw["w_k"], raw["w_v"]], axis=1),
        "w_final": raw["w_final"],
    }


# ---------------------------------------------------------------------------
# ContextMHA forward (no cache, parallel_gpu=1, dropout=0, no positional bias).
# ---------------------------------------------------------------------------
def context_mha_forward(key, value, query, mask, params, heads, dim_per_head):
    # key/value: [B, Lk, E], query: [B, Lq, E], mask: [B, 1, Lq, Lk] bool (True = masked)
    B, Lk, E = key.shape
    Lq = query.shape[1]
    H, D = heads, dim_per_head
    HD = H * D

    # --- projections (tiled Pallas GEMMs, K/V fused when inputs are shared) ---
    q_p = linear(query.reshape(B * Lq, E), params["w_q"])             # [B*Lq, HD]
    if key is value:
        kv_p = linear(key.reshape(B * Lk, E), params["w_kv"])         # [B*Lk, 2*HD]
        k_p, v_p = kv_p[:, :HD], kv_p[:, HD:]
    else:
        k_p = linear(key.reshape(B * Lk, E), params["w_kv"][:, :HD])
        v_p = linear(value.reshape(B * Lk, E), params["w_kv"][:, HD:])

    # shape(): [B, L, H*D] -> [B, H, L, D]
    # TODO(synk): when D % 128 == 0, replace these transposes with head-sliced
    # BlockSpecs over the [B, L, H*D] layout (lane-dense, zero relayout passes).
    def shp(x, L):
        return x.reshape(B, L, H, D).transpose(0, 2, 1, 3)

    q_h, k_h, v_h = shp(q_p, Lq), shp(k_p, Lk), shp(v_p, Lk)

    # mask as int8 tiles (never a full fp32 score-sized array)
    if mask is None:
        mask_i8 = jnp.zeros((B, Lq, Lk), jnp.int8)
    else:
        mask_i8 = jnp.broadcast_to(mask, (B, 1, Lq, Lk)).reshape(B, Lq, Lk).astype(jnp.int8)
    # TODO(synk): for pure padding masks, pass per-batch key lengths via
    # PrefetchScalarGridSpec and rebuild the mask in-kernel with iota instead.

    attn_out = flash_attention(q_h, k_h, v_h, mask_i8)                # [B, H, Lq, D]

    # unshape(): [B, H, Lq, D] -> [B, Lq, H*D]
    context = attn_out.transpose(0, 2, 1, 3).reshape(B * Lq, HD)

    out = linear(context, params["w_final"]).reshape(B, Lq, E)
    return out, None  # attn is None on this path (return_attn=False)


# ---------------------------------------------------------------------------
# Pure-JAX reference with the SAME precision policy (bf16 MXU operands, fp32
# accumulation / softmax) so the check validates tiling/masking/online-softmax.
# ---------------------------------------------------------------------------
def ref_forward(key, value, query, mask, raw, heads, dim_per_head):
    B, Lk, E = key.shape
    Lq = query.shape[1]
    H, D = heads, dim_per_head

    def mm(a, b):
        return jnp.dot(a.astype(jnp.bfloat16), b.astype(jnp.bfloat16),
                       preferred_element_type=jnp.float32)

    q = mm(query.reshape(-1, E), raw["w_q"] / math.sqrt(D)).reshape(B, Lq, H, D).transpose(0, 2, 1, 3)
    k = mm(key.reshape(-1, E), raw["w_k"]).reshape(B, Lk, H, D).transpose(0, 2, 1, 3)
    v = mm(value.reshape(-1, E), raw["w_v"]).reshape(B, Lk, H, D).transpose(0, 2, 1, 3)

    s = jnp.einsum("bhqd,bhkd->bhqk", q.astype(jnp.bfloat16), k.astype(jnp.bfloat16),
                   preferred_element_type=jnp.float32)
    s = jnp.where(mask, jnp.float32(-1e18), s)
    p = jax.nn.softmax(s, axis=-1)
    ctx = jnp.einsum("bhqk,bhkd->bhqd", p.astype(jnp.bfloat16), v.astype(jnp.bfloat16),
                     preferred_element_type=jnp.float32)
    ctx = ctx.transpose(0, 2, 1, 3).reshape(B * Lq, H * D)
    return mm(ctx, raw["w_final"]).reshape(B, Lq, E)


if __name__ == "__main__":
    # Small config consistent with the module: hidden=32, heads=4, dim_per_head=8.
    B, Lq, Lk = 2, 8, 8
    hidden, heads, dim_per_head = 32, 4, 8

    k0 = jax.random.PRNGKey(0)
    ks = jax.random.split(k0, 8)
    # ContextMHA is cross-attention: key and value come from the same memory bank.
    memory = jax.random.normal(ks[0], (B, Lk, hidden), jnp.float32)
    query = jax.random.normal(ks[2], (B, Lq, hidden), jnp.float32)

    # mask: True = key position masked out; mask out last 3 keys of batch 1.
    mask = jnp.zeros((B, 1, Lq, Lk), jnp.bool_)
    mask = mask.at[1, :, :, Lk - 3:].set(True)

    scale = 1.0 / math.sqrt(hidden)
    raw = {
        "w_q": jax.random.normal(ks[3], (hidden, heads * dim_per_head), jnp.float32) * scale,
        "w_k": jax.random.normal(ks[4], (hidden, heads * dim_per_head), jnp.float32) * scale,
        "w_v": jax.random.normal(ks[5], (hidden, heads * dim_per_head), jnp.float32) * scale,
        "w_final": jax.random.normal(ks[6], (heads * dim_per_head, hidden), jnp.float32) * scale,
    }
    params = prepare_params(raw, dim_per_head)
    # TODO(synk): add_qkvbias / GQA (heads_kv<heads) / dropout / layer_cache /
    # relative-position / rotary paths are not exercised by ContextMHA's default config.

    out, attn = context_mha_forward(memory, memory, query, mask, params, heads, dim_per_head)
    out = jax.block_until_ready(out)
    assert attn is None

    ref = ref_forward(memory, memory, query, mask, raw, heads, dim_per_head)
    # bf16 MXU operands (per perf review) -> compare vs a matched-precision reference.
    np.testing.assert_allclose(np.asarray(out), np.asarray(ref), atol=2e-2, rtol=2e-2)

    print("KERNEL_OK")
</pallas_src>

<mosaic_0001>
module attributes {stable_mosaic.version = 11 : i64} {
  func.func @_matmul_kernel(%arg0: i32, %arg1: i32, %arg2: i32, %arg3: memref<16x32xf32, #tpu.memory_space<vmem>>, %arg4: memref<32x32xf32, #tpu.memory_space<vmem>>, %arg5: memref<16x32xf32, #tpu.memory_space<vmem>>, %arg6: memref<16x32xf32, #tpu.memory_space<vmem>>) attributes {dimension_semantics = [#tpu.dimension_semantics<parallel>, #tpu.dimension_semantics<parallel>, #tpu.dimension_semantics<arbitrary>], iteration_bounds = array<i64: 1, 1, 1>, scalar_prefetch = 0 : i64, scratch_operands = 1 : i64, tpu.core_type = #tpu.core_type<tc>, window_params = [{transform_indices = @transform_0, window_bounds = array<i64: 16, 32>}, {transform_indices = @transform_1, window_bounds = array<i64: 32, 32>}, {transform_indices = @transform_2, window_bounds = array<i64: 16, 32>}]} {
    %c0_i32 = arith.constant 0 : i32
    %0 = arith.cmpi eq, %arg2, %c0_i32 : i32
    %1 = arith.extui %0 : i1 to i32
    %c0_i32_0 = arith.constant 0 : i32
    %2 = arith.cmpi ne, %1, %c0_i32_0 : i32
    scf.if %2 {
      %cst_10 = arith.constant 0.000000e+00 : f32
      %14 = vector.broadcast %cst_10 : f32 to vector<16x32xf32>
      %c0_11 = arith.constant 0 : index
      %c0_12 = arith.constant 0 : index
      %15 = vector.load %arg6[%c0_11, %c0_12] : memref<16x32xf32, #tpu.memory_space<vmem>>, vector<16x32xf32>
      tpu.vector_store %arg6[%c0_11, %c0_12], %14 {strides = array<i32>} : memref<16x32xf32, #tpu.memory_space<vmem>>, vector<16x32xf32>,
    } else {
    }
    %c0 = arith.constant 0 : index
    %c0_1 = arith.constant 0 : index
    %3 = vector.load %arg6[%c0, %c0_1] : memref<16x32xf32, #tpu.memory_space<vmem>>, vector<16x32xf32>
    %c0_2 = arith.constant 0 : index
    %c0_3 = arith.constant 0 : index
    %4 = vector.load %arg3[%c0_2, %c0_3] : memref<16x32xf32, #tpu.memory_space<vmem>>, vector<16x32xf32>
    %5 = arith.truncf %4 : vector<16x32xf32> to vector<16x32xbf16>
    %c0_4 = arith.constant 0 : index
    %c0_5 = arith.constant 0 : index
    %6 = vector.load %arg4[%c0_4, %c0_5] : memref<32x32xf32, #tpu.memory_space<vmem>>, vector<32x32xf32>
    %7 = arith.truncf %6 : vector<32x32xf32> to vector<32x32xbf16>
    %cst = arith.constant dense<0.000000e+00> : vector<16x32xf32>
    %8 = tpu.matmul %5, %7, %cst {dimension_numbers = #tpu.dot_dimension_numbers<[1], [0], [0], [1], [0, 0, 1, 1], [], []>} : vector<16x32xbf16>, vector<32x32xbf16>, vector<16x32xf32> -> vector<16x32xf32>
    %9 = arith.addf %3, %8 : vector<16x32xf32>
    %c0_6 = arith.constant 0 : index
    %c0_7 = arith.constant 0 : index
    %10 = vector.load %arg6[%c0_6, %c0_7] : memref<16x32xf32, #tpu.memory_space<vmem>>, vector<16x32xf32>
    tpu.vector_store %arg6[%c0_6, %c0_7], %9 {strides = array<i32>} : memref<16x32xf32, #tpu.memory_space<vmem>>, vector<16x32xf32>,
    %c0_i32_8 = arith.constant 0 : i32
    %11 = arith.cmpi eq, %arg2, %c0_i32_8 : i32
    %12 = arith.extui %11 : i1 to i32
    %c0_i32_9 = arith.constant 0 : i32
    %13 = arith.cmpi ne, %12, %c0_i32_9 : i32
    scf.if %13 {
      %c0_10 = arith.constant 0 : index
      %c0_11 = arith.constant 0 : index
      %14 = vector.load %arg6[%c0_10, %c0_11] : memref<16x32xf32, #tpu.memory_space<vmem>>, vector<16x32xf32>
      %c0_12 = arith.constant 0 : index
      %c0_13 = arith.constant 0 : index
      %15 = vector.load %arg5[%c0_12, %c0_13] : memref<16x32xf32, #tpu.memory_space<vmem>>, vector<16x32xf32>
      tpu.vector_store %arg5[%c0_12, %c0_13], %14 {strides = array<i32>} : memref<16x32xf32, #tpu.memory_space<vmem>>, vector<16x32xf32>,
    } else {
    }
    return
  }
  func.func @transform_0(%arg0: i32, %arg1: i32, %arg2: i32) -> (i32, i32) {
    %c0_i32 = arith.constant 0 : i32
    return %arg0, %arg2 : i32, i32
  }
  func.func @transform_1(%arg0: i32, %arg1: i32, %arg2: i32) -> (i32, i32) {
    %c0_i32 = arith.constant 0 : i32
    return %arg2, %arg1 : i32, i32
  }
  func.func @transform_2(%arg0: i32, %arg1: i32, %arg2: i32) -> (i32, i32) {
    %c0_i32 = arith.constant 0 : i32
    return %arg0, %arg1 : i32, i32
  }
}

</mosaic_0001>

<llo_original>
// kernel: tpu_custom_call.1
$region0: #{tpu_custom_call.1}
  #allocation0 [shape = 'u32[]', space=smem, size = 0x4, offset = 0x4, fixed_abs, tag = 'smem constant byte address 0x4 - core index']
  #allocation1 [shape = 'u32[144,128]{1,0:T(1,128)}', space=vmem, size = 0x12000, scoped, tag = 'internal scratch']
  #allocation2 [shape = 'f32[16,32]{1,0:T(8,128)}', space=vmem, size = 0x2000, scoped, tag = 'scratch operand']
  %s0 = inlined_call_operand.hbm [shape: f32[16,32], index: 0, kind: input, shape index: {}]
  %s1 = inlined_call_operand.hbm [shape: f32[32,32], index: 1, kind: input, shape index: {}]
  %s2 = inlined_call_operand.hbm [shape: f32[16,32], index: 2, kind: output, shape index: {}]
  %s3 = sld [smem:[#allocation0]]
  $region34: #{tpu_custom_call.1} parent=0
    _
  %s5 = ssub.s32 1, %s3
  %s6 = scalar_select 0, %s5, %s3
  $region1: #{tpu_custom_call.1} parent=0
    #allocation3 [shape = 'u8[8192]{0}', space=vmem, size = 0x2000, scoped, tag = 'input window, operand 0, single buffered']
    #allocation4 [shape = 's32[1]{0}', space=sflag, size = 0x4, scoped, tag = 'scoped memory for tpu_custom_call.1']
    #allocation5 [shape = 's32[1]{0}', space=sflag, size = 0x4, scoped, tag = 'scoped memory for tpu_custom_call.1']
    #allocation6 [shape = 'u8[16384]{0}', space=vmem, size = 0x4000, scoped, tag = 'input window, operand 1, single buffered']
    #allocation7 [shape = 's32[1]{0}', space=sflag, size = 0x4, scoped, tag = 'scoped memory for tpu_custom_call.1']
    #allocation8 [shape = 'u8[8192]{0}', space=vmem, size = 0x2000, scoped, tag = 'output window, operand 0, single buffered']
    %7 = vsyncpa [#allocation4], 0
    %8 = vsyncpa [#allocation7], 0
    %9 = vsyncpa [#allocation5], 0
    // Predicated region
    $region2: #{tpu_custom_call.1} parent=1 // pred_check
      _
    $region3: #{tpu_custom_call.1} parent=1 // pred_check_branch
      %11 = sbr.rel (0) target = $region5
    $region4: #{tpu_custom_call.1} parent=1 // pred_region
      %s13 = ssub.s32 256, 256
      %14 = vsyncadd [#allocation4], %s13
      %s15 = sshll.u32 [#allocation3], 4
      %s16 = int_to_ptr.vmem [resolvable:$true] %s15
      %21 = dma.hbm_to_vmem [thread:$0]  %s0, 256, %s16, [#allocation4], 128, 128, 8
    $region5: #{tpu_custom_call.1} parent=1 // pred_fallthru
      _
    // Predicated region
    $region6: #{tpu_custom_call.1} parent=1 // pred_check
      _
    $region7: #{tpu_custom_call.1} parent=1 // pred_check_branch
      %23 = sbr.rel (0) target = $region9
    $region8: #{tpu_custom_call.1} parent=1 // pred_region
      %s25 = ssub.s32 512, 512
      %26 = vsyncadd [#allocation7], %s25
      %s27 = sshll.u32 [#allocation6], 4
      %s28 = int_to_ptr.vmem [resolvable:$true] %s27
      %33 = dma.hbm_to_vmem [thread:$0]  %s1, 512, %s28, [#allocation7], 128, 128, 8
    $region9: #{tpu_custom_call.1} parent=1 // pred_fallthru
      _
    // Predicated region
    $region10: #{tpu_custom_call.1} parent=1 // pred_check
      _
    $region11: #{tpu_custom_call.1} parent=1 // pred_check_branch
      %35 = sbr.rel (0) target = $region13
    $region12: #{tpu_custom_call.1} parent=1 // pred_region
      %36 = dma.done [#allocation4], 256
    $region13: #{tpu_custom_call.1} parent=1 // pred_fallthru
      _
    // Predicated region
    $region14: #{tpu_custom_call.1} parent=1 // pred_check
      _
    $region15: #{tpu_custom_call.1} parent=1 // pred_check_branch
      %38 = sbr.rel (0) target = $region17
    $region16: #{tpu_custom_call.1} parent=1 // pred_region
      %39 = dma.done [#allocation7], 512
    $region17: #{tpu_custom_call.1} parent=1 // pred_fallthru
      _
    %p41 = scmp.eq.s32.totalorder 0, 0
    // Predicated region
    $region18: #{tpu_custom_call.1} parent=1 // pred_check
      %p42 = pneg %p41
    $region19: #{tpu_custom_call.1} parent=1 // pred_check_branch
      %44 = sbr.rel (%p42) target = $region21
    $region20: #{tpu_custom_call.1} parent=1 // pred_region
      %vm45 = vcmask 261120
      %46 = vst.msk [vmem:[#allocation2] sm:$0xff] %vm45, 0.0
      %47 = vst.msk [vmem:[#allocation2 + $0x8] sm:$0xff] %vm45, 0.0
    $region21: #{tpu_custom_call.1} parent=1 // pred_fallthru
      _
    %v48 = vld [vmem:[#allocation2] sm:$0xff]
    %v49 = vld [vmem:[#allocation2 + $0x8] sm:$0xff]
    %v50 = vld [vmem:[#allocation3] sm:$0xff]
    %v51 = vld [vmem:[#allocation3 + $0x8] sm:$0xff]
    %v52 = vpack.c.bf16 %v51, %v50
    %v53 = vld [vmem:[#allocation6] sm:$0xff]
    %v54 = vld [vmem:[#allocation6 + $0x8] sm:$0xff]
    %v55 = vld [vmem:[#allocation6 + $0x10] sm:$0xff]
    %v56 = vld [vmem:[#allocation6 + $0x18] sm:$0xff]
    %v57 = vpack.c.bf16 %v54, %v53
    %v58 = vpack.c.bf16 %v56, %v55
    %vm59 = vcmask 261120
    %v61 = vsel %vm59, %v52, 0
    %63 = vmatprep.subr.bf16.mxu0 0
    %64 = vmatpush1.bf16.msra.mxu0 %v57
    %65 = vmatprep.subr.bf16.mxu0 0
    %66 = vmatpush1.bf16.msra.mxu0 %v58
    %67 = vmatprep.subr.bf16.mxu0 0
    %68 = vmatpush1.bf16.msra.mxu0 0
    %69 = vmatprep.subr.bf16.mxu0 0
    %70 = vmatpush1.bf16.msra.mxu0 0
    %71 = vmatprep.subr.bf16.mxu0 0
    %72 = vmatpush1.bf16.msra.mxu0 0
    %73 = vmatprep.subr.bf16.mxu0 0
    %74 = vmatpush1.bf16.msra.mxu0 0
    %75 = vmatprep.subr.bf16.mxu0 0
    %76 = vmatpush1.bf16.msra.mxu0 0
    %77 = vmatprep.subr.bf16.mxu0 0
    %78 = vmatpush1.bf16.msra.mxu0 0
    %79 = vmatprep.subr.bf16.mxu0 0
    %80 = vmatpush1.bf16.msra.mxu0 0
    %81 = vmatprep.subr.bf16.mxu0 0
    %82 = vmatpush1.bf16.msra.mxu0 0
    %83 = vmatprep.subr.bf16.mxu0 0
    %84 = vmatpush1.bf16.msra.mxu0 0
    %85 = vmatprep.subr.bf16.mxu0 0
    %86 = vmatpush1.bf16.msra.mxu0 0
    %87 = vmatprep.subr.bf16.mxu0 0
    %88 = vmatpush1.bf16.msra.mxu0 0
    %89 = vmatprep.subr.bf16.mxu0 0
    %90 = vmatpush1.bf16.msra.mxu0 0
    %91 = vmatprep.subr.bf16.mxu0 0
    %92 = vmatpush1.bf16.msra.mxu0 0
    %93 = vmatprep.subr.bf16.mxu0 0
    %94 = vmatpush1.bf16.msra.mxu0 0
    %95 = vmatprep.mubr.bf16.mxu0 0
    %96 = vmatmul.mubr.bf16.gmra.mrb[0].mxu0 %v61
    %v97 = vpop.f32.mrb[0].mxu0
    %v98 = vadd.f32 0.0, %v97
    %v99 = vpop.f32.mrb[0].mxu0
    %v100 = vpop.f32.mrb[0].mxu0
    %v101 = vadd.f32 0.0, %v100
    %v102 = vpop.f32.mrb[0].mxu0
    %103 = vdwg.mxu0
    %v104 = vadd.f32 %v48, %v98
    %v105 = vadd.f32 %v49, %v101
    %106 = vst.msk [vmem:[#allocation2] sm:$0xff] %vm59, %v104
    %107 = vst.msk [vmem:[#allocation2 + $0x8] sm:$0xff] %vm59, %v105
    // Predicated region
    $region22: #{tpu_custom_call.1} parent=1 // pred_check
      %p108 = pneg %p41
    $region23: #{tpu_custom_call.1} parent=1 // pred_check_branch
      %110 = sbr.rel (%p108) target = $region25
    $region24: #{tpu_custom_call.1} parent=1 // pred_region
      %v111 = vld [vmem:[#allocation2] sm:$0xff]
      %v112 = vld [vmem:[#allocation2 + $0x8] sm:$0xff]
      %113 = vst.msk [vmem:[#allocation8] sm:$0xff] %vm59, %v111
      %114 = vst.msk [vmem:[#allocation8 + $0x8] sm:$0xff] %vm59, %v112
    $region25: #{tpu_custom_call.1} parent=1 // pred_fallthru
      _
    // Predicated region
    $region26: #{tpu_custom_call.1} parent=1 // pred_check
      _
    $region27: #{tpu_custom_call.1} parent=1 // pred_check_branch
      %116 = sbr.rel (0) target = $region29
    $region28: #{tpu_custom_call.1} parent=1 // pred_region
      %s118 = ssub.s32 256, 256
      %119 = vsyncadd [#allocation5], %s118
      %s120 = sshll.u32 [#allocation8], 4
      %s121 = int_to_ptr.vmem [resolvable:$true] %s120
      %126 = dma.vmem_to_hbm [thread:$0]  %s121, 256, %s2, [#allocation5], 128, 128, 8
    $region29: #{tpu_custom_call.1} parent=1 // pred_fallthru
      _
    // Predicated region
    $region30: #{tpu_custom_call.1} parent=1 // pred_check
      _
    $region31: #{tpu_custom_call.1} parent=1 // pred_check_branch
      %128 = sbr.rel (0) target = $region33
    $region32: #{tpu_custom_call.1} parent=1 // pred_region
      %129 = dma.done [#allocation5], 256
    $region33: #{tpu_custom_call.1} parent=1 // pred_fallthru
      _
    %130 = vsyncpa [#allocation4], 1
    %131 = vsyncpa [#allocation7], 1
    %132 = vsyncpa [#allocation5], 1

</llo_original>
